<compile_context>
chip_gen: v6e
topology: v6e:2x2x1
jax: 0.10.0
libtpu: 0.0.40
codegen_flags: <defaults>
</compile_context>

<pallas_src>
import functools
import math

import jax
import jax.numpy as jnp
from jax.experimental import pallas as pl
from jax.experimental.pallas import tpu as pltpu


def _round_up(x, m):
    return ((x + m - 1) // m) * m


def _patch_embed_kernel(p_ref, w_ref, b_ref, g_ref, beta_ref, o_ref, *, n_valid, eps):
    # Conv-as-matmul on the MXU (bf16 inputs, f32 accumulation).
    acc = jnp.dot(p_ref[...], w_ref[...], preferred_element_type=jnp.float32)
    acc = acc + b_ref[...]                       # (TM, Np) + (1, Np); padded lanes stay 0

    # LayerNorm over the true embed dim.  Padded lanes of `acc` are exactly zero (zero W
    # columns + zero bias), so a plain sum is already the sum over the valid lanes; the
    # denominator must still be the true embed_dim, and the variance must exclude the
    # (acc - mean) values on padded lanes, hence the lane mask.
    inv_n = jnp.float32(1.0 / n_valid)
    mean = jnp.sum(acc, axis=-1, keepdims=True) * inv_n
    lane = jax.lax.broadcasted_iota(jnp.int32, acc.shape, dimension=1)
    centered = jnp.where(lane < n_valid, acc - mean, 0.0)
    var = jnp.sum(centered * centered, axis=-1, keepdims=True) * inv_n
    xhat = centered * jax.lax.rsqrt(var + eps)
    # Padded gamma/beta are zero, so padded output lanes are written as exact zeros
    # (lane-dense unmasked stores); the wrapper slices them off.
    o_ref[...] = (xhat * g_ref[...] + beta_ref[...]).astype(o_ref.dtype)


def _extract_patches(x, kh, kw, stride, padding):
    """x: (B, C, H, W) NCHW -> patches (B*Ho*Wo, C*kh*kw) with columns in (c, kh, kw) order."""
    B, C, H, W = x.shape
    ph, pw = padding
    p = jax.lax.conv_general_dilated_patches(
        x, filter_shape=(kh, kw), window_strides=(stride, stride),
        padding=((ph, ph), (pw, pw)),
        dimension_numbers=("NCHW", "OIHW", "NCHW"))
    # p: (B, C*kh*kw, Ho, Wo); feature ordering is (c, kh, kw) which matches
    # conv_w.reshape(embed_dim, C*kh*kw) from OIHW.
    _, K, Ho, Wo = p.shape
    p = jnp.transpose(p, (0, 2, 3, 1)).reshape(B * Ho * Wo, K)
    return p, Ho, Wo


def overlap_patch_embed(x, conv_w, conv_b, ln_gamma, ln_beta, *, stride, padding,
                        compute_dtype=jnp.bfloat16, block_m=512, eps=1e-5):
    """x: (B, C_in, H, W) NCHW.  Returns (y, H_out, W_out), y: (B, H_out*W_out, embed_dim)."""
    B = x.shape[0]
    embed_dim, in_chans, kh, kw = conv_w.shape

    patches, Ho, Wo = _extract_patches(x, kh, kw, stride, padding)
    M, K = patches.shape
    N = embed_dim

    # Lane/sublane-aligned padded shapes.
    Kp = _round_up(K, 128)
    Np = _round_up(N, 128)
    TM = block_m if M >= block_m else _round_up(M, 16)   # 512-row tiles; small-case shrink
    Mp = _round_up(M, TM)

    # MXU inputs in bf16 (halves dominant HBM read traffic); params stay f32.
    p_pad = jnp.pad(patches, ((0, Mp - M), (0, Kp - K))).astype(compute_dtype)
    w_mat = jnp.transpose(conv_w.reshape(embed_dim, K))                    # (K, N)
    w_pad = jnp.pad(w_mat, ((0, Kp - K), (0, Np - N))).astype(compute_dtype)
    b_pad = jnp.pad(conv_b.astype(jnp.float32), (0, Np - N)).reshape(1, Np)
    g_pad = jnp.pad(ln_gamma.astype(jnp.float32), (0, Np - N)).reshape(1, Np)
    beta_pad = jnp.pad(ln_beta.astype(jnp.float32), (0, Np - N)).reshape(1, Np)

    grid = (Mp // TM,)
    itemsize = jnp.dtype(compute_dtype).itemsize
    kernel = functools.partial(_patch_embed_kernel, n_valid=N, eps=eps)

    out = pl.pallas_call(
        kernel,
        out_shape=jax.ShapeDtypeStruct((Mp, Np), jnp.float32),
        grid=grid,
        in_specs=[
            pl.BlockSpec((TM, Kp), lambda i: (i, 0)),   # P tile walks over M (double-buffered)
            pl.BlockSpec((Kp, Np), lambda i: (0, 0)),   # W resident across the whole grid
            pl.BlockSpec((1, Np), lambda i: (0, 0)),    # bias
            pl.BlockSpec((1, Np), lambda i: (0, 0)),    # gamma
            pl.BlockSpec((1, Np), lambda i: (0, 0)),    # beta
        ],
        out_specs=pl.BlockSpec((TM, Np), lambda i: (i, 0)),
        compiler_params=pltpu.CompilerParams(
            dimension_semantics=("parallel",)),          # shard M tiles across v7x's 2 TCs
        cost_estimate=pl.CostEstimate(
            flops=2 * Mp * Kp * Np + 8 * Mp * Np,
            transcendentals=Mp,
            bytes_accessed=(Mp * Kp + Kp * Np) * itemsize + Mp * Np * 4),
    )(p_pad, w_pad, b_pad, g_pad, beta_pad)

    y = out[:M, :N].astype(x.dtype).reshape(B, Ho * Wo, N)
    return y, Ho, Wo


def _reference(x, conv_w, conv_b, ln_gamma, ln_beta, *, stride, padding,
               compute_dtype=jnp.float32):
    y = jax.lax.conv_general_dilated(
        x.astype(compute_dtype), conv_w.astype(compute_dtype),
        window_strides=(stride, stride),
        padding=((padding[0], padding[0]), (padding[1], padding[1])),
        dimension_numbers=("NCHW", "OIHW", "NCHW"),
        preferred_element_type=jnp.float32)
    y = y + conv_b[None, :, None, None].astype(jnp.float32)
    B, C, Ho, Wo = y.shape
    y = jnp.transpose(y.reshape(B, C, Ho * Wo), (0, 2, 1))          # (B, Ho*Wo, C)
    mean = jnp.mean(y, axis=-1, keepdims=True)
    var = jnp.mean((y - mean) ** 2, axis=-1, keepdims=True)
    y = (y - mean) * jax.lax.rsqrt(var + 1e-5) * ln_gamma + ln_beta
    return y.astype(x.dtype), Ho, Wo


if __name__ == "__main__":
    # Small shapes consistent with the module: patch_size=7, stride=4, in_chans=4,
    # embed_dim=32 -> input x: (2, 4, 16, 16), conv output 4x4 spatial.
    B, C_in, H, W = 2, 4, 16, 16
    patch_size, stride, embed_dim = 7, 4, 32
    padding = ((patch_size - 1) // 2, (patch_size - 1) // 2)

    key = jax.random.PRNGKey(0)
    kx, kw = jax.random.split(key)
    x = jax.random.normal(kx, (B, C_in, H, W), dtype=jnp.float32)

    # Deterministic parameter init mirroring _init_weights:
    #   Conv2d weight ~ N(0, sqrt(2 / fan_out)), bias = 0; LayerNorm gamma=1, beta=0
    fan_out = patch_size * patch_size * embed_dim
    conv_w = jax.random.normal(kw, (embed_dim, C_in, patch_size, patch_size),
                               dtype=jnp.float32) * math.sqrt(2.0 / fan_out)
    conv_b = jnp.zeros((embed_dim,), dtype=jnp.float32)
    ln_gamma = jnp.ones((embed_dim,), dtype=jnp.float32)
    ln_beta = jnp.zeros((embed_dim,), dtype=jnp.float32)

    y, Ho, Wo = overlap_patch_embed(x, conv_w, conv_b, ln_gamma, ln_beta,
                                    stride=stride, padding=padding)
    y = jax.block_until_ready(y)

    # Tight check against a reference that also feeds bf16 into the conv (same quantization,
    # differences are only f32 accumulation order + LN rounding).
    y_ref_bf16, Ho_r, Wo_r = _reference(x, conv_w, conv_b, ln_gamma, ln_beta,
                                        stride=stride, padding=padding,
                                        compute_dtype=jnp.bfloat16)
    # Loose sanity check against the pure-f32 reference (bounds the bf16 quantization error).
    y_ref_f32, _, _ = _reference(x, conv_w, conv_b, ln_gamma, ln_beta,
                                 stride=stride, padding=padding,
                                 compute_dtype=jnp.float32)

    assert (Ho, Wo) == (Ho_r, Wo_r)
    assert y.shape == (B, Ho * Wo, embed_dim)
    err_bf16 = float(jnp.max(jnp.abs(y - y_ref_bf16)))
    err_f32 = float(jnp.max(jnp.abs(y - y_ref_f32)))
    assert err_bf16 < 2e-3, f"mismatch vs bf16-input reference: {err_bf16}"
    assert err_f32 < 5e-2, f"mismatch vs f32 reference: {err_f32}"

    print("KERNEL_OK")
</pallas_src>

<mosaic_0001>
module attributes {stable_mosaic.version = 11 : i64} {
  func.func @_patch_embed_kernel(%arg0: i32, %arg1: memref<32x256xbf16, #tpu.memory_space<vmem>>, %arg2: memref<256x128xbf16, #tpu.memory_space<vmem>>, %arg3: memref<1x128xf32, #tpu.memory_space<vmem>>, %arg4: memref<1x128xf32, #tpu.memory_space<vmem>>, %arg5: memref<1x128xf32, #tpu.memory_space<vmem>>, %arg6: memref<32x128xf32, #tpu.memory_space<vmem>>) attributes {dimension_semantics = [#tpu.dimension_semantics<parallel>], iteration_bounds = array<i64: 1>, scalar_prefetch = 0 : i64, scratch_operands = 0 : i64, tpu.core_type = #tpu.core_type<tc>, window_params = [{transform_indices = @transform_0, window_bounds = array<i64: 32, 256>}, {pipeline_mode = #tpu.pipeline_mode<synchronous>, transform_indices = @transform_1, window_bounds = array<i64: 256, 128>}, {pipeline_mode = #tpu.pipeline_mode<synchronous>, transform_indices = @transform_2, window_bounds = array<i64: 1, 128>}, {pipeline_mode = #tpu.pipeline_mode<synchronous>, transform_indices = @transform_3, window_bounds = array<i64: 1, 128>}, {pipeline_mode = #tpu.pipeline_mode<synchronous>, transform_indices = @transform_4, window_bounds = array<i64: 1, 128>}, {transform_indices = @transform_5, window_bounds = array<i64: 32, 128>}]} {
    %c0 = arith.constant 0 : index
    %c0_0 = arith.constant 0 : index
    %0 = vector.load %arg1[%c0, %c0_0] : memref<32x256xbf16, #tpu.memory_space<vmem>>, vector<32x256xbf16>
    %c0_1 = arith.constant 0 : index
    %c0_2 = arith.constant 0 : index
    %1 = vector.load %arg2[%c0_1, %c0_2] : memref<256x128xbf16, #tpu.memory_space<vmem>>, vector<256x128xbf16>
    %cst = arith.constant dense<0.000000e+00> : vector<32x128xf32>
    %2 = tpu.matmul %0, %1, %cst {dimension_numbers = #tpu.dot_dimension_numbers<[1], [0], [0], [1], [0, 0, 1, 1], [], []>} : vector<32x256xbf16>, vector<256x128xbf16>, vector<32x128xf32> -> vector<32x128xf32>
    %c0_3 = arith.constant 0 : index
    %c0_4 = arith.constant 0 : index
    %3 = vector.load %arg3[%c0_3, %c0_4] : memref<1x128xf32, #tpu.memory_space<vmem>>, vector<1x128xf32>
    %4 = vector.broadcast %3 : vector<1x128xf32> to vector<32x128xf32>
    %5 = arith.addf %2, %4 : vector<32x128xf32>
    %cst_5 = arith.constant dense<0.000000e+00> : vector<32xf32>
    %6 = vector.multi_reduction <add>, %5, %cst_5 [1] : vector<32x128xf32> to vector<32xf32>
    %7 = vector.shape_cast %6 : vector<32xf32> to vector<32x1xf32>
    %cst_6 = arith.constant 3.125000e-02 : f32
    %8 = vector.broadcast %cst_6 : f32 to vector<32x1xf32>
    %9 = arith.mulf %7, %8 : vector<32x1xf32>
    %10 = tpu.iota {dimensions = array<i32: 1>} : vector<32x128xi32>
    %c32_i32 = arith.constant 32 : i32
    %11 = vector.broadcast %c32_i32 : i32 to vector<32x128xi32>
    %12 = arith.cmpi slt, %10, %11 : vector<32x128xi32>
    %13 = vector.broadcast %9 : vector<32x1xf32> to vector<32x128xf32>
    %14 = arith.subf %5, %13 : vector<32x128xf32>
    %cst_7 = arith.constant 0.000000e+00 : f32
    %15 = vector.broadcast %cst_7 : f32 to vector<32x128xf32>
    %16 = arith.select %12, %14, %15 : vector<32x128xi1>, vector<32x128xf32>
    %17 = arith.mulf %16, %16 : vector<32x128xf32>
    %cst_8 = arith.constant dense<0.000000e+00> : vector<32xf32>
    %18 = vector.multi_reduction <add>, %17, %cst_8 [1] : vector<32x128xf32> to vector<32xf32>
    %19 = vector.shape_cast %18 : vector<32xf32> to vector<32x1xf32>
    %cst_9 = arith.constant 3.125000e-02 : f32
    %20 = vector.broadcast %cst_9 : f32 to vector<32x1xf32>
    %21 = arith.mulf %19, %20 : vector<32x1xf32>
    %cst_10 = arith.constant 9.99999974E-6 : f32
    %22 = vector.broadcast %cst_10 : f32 to vector<32x1xf32>
    %23 = arith.addf %21, %22 : vector<32x1xf32>
    %24 = math.rsqrt %23 : vector<32x1xf32>
    %25 = vector.broadcast %24 : vector<32x1xf32> to vector<32x128xf32>
    %26 = arith.mulf %16, %25 : vector<32x128xf32>
    %c0_11 = arith.constant 0 : index
    %c0_12 = arith.constant 0 : index
    %27 = vector.load %arg4[%c0_11, %c0_12] : memref<1x128xf32, #tpu.memory_space<vmem>>, vector<1x128xf32>
    %28 = vector.broadcast %27 : vector<1x128xf32> to vector<32x128xf32>
    %29 = arith.mulf %26, %28 : vector<32x128xf32>
    %c0_13 = arith.constant 0 : index
    %c0_14 = arith.constant 0 : index
    %30 = vector.load %arg5[%c0_13, %c0_14] : memref<1x128xf32, #tpu.memory_space<vmem>>, vector<1x128xf32>
    %31 = vector.broadcast %30 : vector<1x128xf32> to vector<32x128xf32>
    %32 = arith.addf %29, %31 : vector<32x128xf32>
    %c0_15 = arith.constant 0 : index
    %c0_16 = arith.constant 0 : index
    %33 = vector.load %arg6[%c0_15, %c0_16] : memref<32x128xf32, #tpu.memory_space<vmem>>, vector<32x128xf32>
    tpu.vector_store %arg6[%c0_15, %c0_16], %32 {strides = array<i32>} : memref<32x128xf32, #tpu.memory_space<vmem>>, vector<32x128xf32>,
    return
  }
  func.func @transform_0(%arg0: i32) -> (i32, i32) {
    %c0_i32 = arith.constant 0 : i32
    %c0_i32_0 = arith.constant 0 : i32
    return %arg0, %c0_i32 : i32, i32
  }
  func.func @transform_1(%arg0: i32) -> (i32, i32) {
    %c0_i32 = arith.constant 0 : i32
    %c0_i32_0 = arith.constant 0 : i32
    %c0_i32_1 = arith.constant 0 : i32
    return %c0_i32, %c0_i32_0 : i32, i32
  }
  func.func @transform_2(%arg0: i32) -> (i32, i32) {
    %c0_i32 = arith.constant 0 : i32
    %c0_i32_0 = arith.constant 0 : i32
    %c0_i32_1 = arith.constant 0 : i32
    return %c0_i32, %c0_i32_0 : i32, i32
  }
  func.func @transform_3(%arg0: i32) -> (i32, i32) {
    %c0_i32 = arith.constant 0 : i32
    %c0_i32_0 = arith.constant 0 : i32
    %c0_i32_1 = arith.constant 0 : i32
    return %c0_i32, %c0_i32_0 : i32, i32
  }
  func.func @transform_4(%arg0: i32) -> (i32, i32) {
    %c0_i32 = arith.constant 0 : i32
    %c0_i32_0 = arith.constant 0 : i32
    %c0_i32_1 = arith.constant 0 : i32
    return %c0_i32, %c0_i32_0 : i32, i32
  }
  func.func @transform_5(%arg0: i32) -> (i32, i32) {
    %c0_i32 = arith.constant 0 : i32
    %c0_i32_0 = arith.constant 0 : i32
    return %arg0, %c0_i32 : i32, i32
  }
}

</mosaic_0001>

<llo_original>
// kernel: tpu_custom_call.1
$region0: #{tpu_custom_call.1}
  #allocation0 [shape = 'u32[]', space=smem, size = 0x4, offset = 0x4, fixed_abs, tag = 'smem constant byte address 0x4 - core index']
  #allocation1 [shape = 'u32[144,128]{1,0:T(1,128)}', space=vmem, size = 0x12000, scoped, tag = 'internal scratch']
  %s0 = inlined_call_operand.hbm [shape: bf16[32,256], index: 0, kind: input, shape index: {}]
  %s1 = inlined_call_operand.hbm [shape: bf16[256,128], index: 1, kind: input, shape index: {}]
  %s2 = inlined_call_operand.vmem [shape: f32[1,128], index: 2, kind: input, shape index: {}]
  %s3 = inlined_call_operand.vmem [shape: f32[1,128], index: 3, kind: input, shape index: {}]
  %s4 = inlined_call_operand.vmem [shape: f32[1,128], index: 4, kind: input, shape index: {}]
  %s5 = inlined_call_operand.hbm [shape: f32[32,128], index: 5, kind: output, shape index: {}]
  %s6 = sld [smem:[#allocation0]]
  $region38: #{tpu_custom_call.1} parent=0
    _
  %s8 = ssub.s32 1, %s6
  %s9 = scalar_select 0, %s8, %s6
  $region1: #{tpu_custom_call.1} parent=0
    #allocation2 [shape = 'u8[16384]{0}', space=vmem, size = 0x4000, scoped, tag = 'input window, operand 0, single buffered']
    #allocation3 [shape = 's32[1]{0}', space=sflag, size = 0x4, scoped, tag = 'scoped memory for tpu_custom_call.1']
    #allocation4 [shape = 's32[1]{0}', space=sflag, size = 0x4, scoped, tag = 'scoped memory for tpu_custom_call.1']
    #allocation5 [shape = 'u8[65536]{0}', space=vmem, size = 0x10000, scoped, tag = 'input window, operand 1, single buffered']
    #allocation6 [shape = 's32[1]{0}', space=sflag, size = 0x4, scoped, tag = 'scoped memory for tpu_custom_call.1']
    #allocation7 [shape = 'u8[16384]{0}', space=vmem, size = 0x4000, scoped, tag = 'output window, operand 0, single buffered']
    %10 = vsyncpa [#allocation3], 0
    %11 = vsyncpa [#allocation6], 0
    %12 = vsyncpa [#allocation4], 0
    // Predicated region
    $region2: #{tpu_custom_call.1} parent=1 // pred_check
      _
    $region3: #{tpu_custom_call.1} parent=1 // pred_check_branch
      %14 = sbr.rel (0) target = $region5
    $region4: #{tpu_custom_call.1} parent=1 // pred_region
      %s16 = ssub.s32 512, 512
      %17 = vsyncadd [#allocation3], %s16
      %s18 = sshll.u32 [#allocation2], 4
      %s19 = int_to_ptr.vmem [resolvable:$true] %s18
      %24 = dma.hbm_to_vmem [thread:$0]  %s0, 512, %s19, [#allocation3], 128, 128, 8
    $region5: #{tpu_custom_call.1} parent=1 // pred_fallthru
      _
    // Predicated region
    $region6: #{tpu_custom_call.1} parent=1 // pred_check
      _
    $region7: #{tpu_custom_call.1} parent=1 // pred_check_branch
      %26 = sbr.rel (0) target = $region9
    $region8: #{tpu_custom_call.1} parent=1 // pred_region
      %s28 = ssub.s32 2048, 2048
      %29 = vsyncadd [#allocation6], %s28
      %s30 = sshll.u32 [#allocation5], 4
      %s31 = int_to_ptr.vmem [resolvable:$true] %s30
      %36 = dma.hbm_to_vmem [thread:$0]  %s1, 2048, %s31, [#allocation6], 64, 64, 4
    $region9: #{tpu_custom_call.1} parent=1 // pred_fallthru
      _
    // Predicated region
    $region10: #{tpu_custom_call.1} parent=1 // pred_check
      _
    $region11: #{tpu_custom_call.1} parent=1 // pred_check_branch
      %38 = sbr.rel (0) target = $region13
    $region12: #{tpu_custom_call.1} parent=1 // pred_region
      _
    $region13: #{tpu_custom_call.1} parent=1 // pred_fallthru
      _
    // Predicated region
    $region14: #{tpu_custom_call.1} parent=1 // pred_check
      _
    $region15: #{tpu_custom_call.1} parent=1 // pred_check_branch
      %40 = sbr.rel (0) target = $region17
    $region16: #{tpu_custom_call.1} parent=1 // pred_region
      _
    $region17: #{tpu_custom_call.1} parent=1 // pred_fallthru
      _
    // Predicated region
    $region18: #{tpu_custom_call.1} parent=1 // pred_check
      _
    $region19: #{tpu_custom_call.1} parent=1 // pred_check_branch
      %42 = sbr.rel (0) target = $region21
    $region20: #{tpu_custom_call.1} parent=1 // pred_region
      _
    $region21: #{tpu_custom_call.1} parent=1 // pred_fallthru
      _
    // Predicated region
    $region22: #{tpu_custom_call.1} parent=1 // pred_check
      _
    $region23: #{tpu_custom_call.1} parent=1 // pred_check_branch
      %44 = sbr.rel (0) target = $region25
    $region24: #{tpu_custom_call.1} parent=1 // pred_region
      %45 = dma.done [#allocation3], 512
    $region25: #{tpu_custom_call.1} parent=1 // pred_fallthru
      _
    // Predicated region
    $region26: #{tpu_custom_call.1} parent=1 // pred_check
      _
    $region27: #{tpu_custom_call.1} parent=1 // pred_check_branch
      %47 = sbr.rel (0) target = $region29
    $region28: #{tpu_custom_call.1} parent=1 // pred_region
      %48 = dma.done [#allocation6], 2048
    $region29: #{tpu_custom_call.1} parent=1 // pred_fallthru
      _
    %v50 = vld [vmem:[#allocation2] sm:$0xff]
    %v51 = vld [vmem:[#allocation2 + $0x8] sm:$0xff]
    %v52 = vld [vmem:[#allocation2 + $0x10] sm:$0xff]
    %v53 = vld [vmem:[#allocation2 + $0x18] sm:$0xff]
    %v54 = vld [vmem:[#allocation5] sm:$0xf]
    %v55 = vld [vmem:[#allocation5 + $0x4] sm:$0xf]
    %v56 = vld [vmem:[#allocation5 + $0x8] sm:$0xf]
    %v57 = vld [vmem:[#allocation5 + $0xc] sm:$0xf]
    %v58 = vld [vmem:[#allocation5 + $0x10] sm:$0xf]
    %v59 = vld [vmem:[#allocation5 + $0x14] sm:$0xf]
    %v60 = vld [vmem:[#allocation5 + $0x18] sm:$0xf]
    %v61 = vld [vmem:[#allocation5 + $0x1c] sm:$0xf]
    %v62 = vld [vmem:[#allocation5 + $0x20] sm:$0xf]
    %v63 = vld [vmem:[#allocation5 + $0x24] sm:$0xf]
    %v64 = vld [vmem:[#allocation5 + $0x28] sm:$0xf]
    %v65 = vld [vmem:[#allocation5 + $0x2c] sm:$0xf]
    %v66 = vld [vmem:[#allocation5 + $0x30] sm:$0xf]
    %v67 = vld [vmem:[#allocation5 + $0x34] sm:$0xf]
    %v68 = vld [vmem:[#allocation5 + $0x38] sm:$0xf]
    %v69 = vld [vmem:[#allocation5 + $0x3c] sm:$0xf]
    %v70 = vld [vmem:[#allocation5 + $0x40] sm:$0xf]
    %v71 = vld [vmem:[#allocation5 + $0x44] sm:$0xf]
    %v72 = vld [vmem:[#allocation5 + $0x48] sm:$0xf]
    %v73 = vld [vmem:[#allocation5 + $0x4c] sm:$0xf]
    %v74 = vld [vmem:[#allocation5 + $0x50] sm:$0xf]
    %v75 = vld [vmem:[#allocation5 + $0x54] sm:$0xf]
    %v76 = vld [vmem:[#allocation5 + $0x58] sm:$0xf]
    %v77 = vld [vmem:[#allocation5 + $0x5c] sm:$0xf]
    %v78 = vld [vmem:[#allocation5 + $0x60] sm:$0xf]
    %v79 = vld [vmem:[#allocation5 + $0x64] sm:$0xf]
    %v80 = vld [vmem:[#allocation5 + $0x68] sm:$0xf]
    %v81 = vld [vmem:[#allocation5 + $0x6c] sm:$0xf]
    %v82 = vld [vmem:[#allocation5 + $0x70] sm:$0xf]
    %v83 = vld [vmem:[#allocation5 + $0x74] sm:$0xf]
    %v84 = vld [vmem:[#allocation5 + $0x78] sm:$0xf]
    %v85 = vld [vmem:[#allocation5 + $0x7c] sm:$0xf]
    %v86 = vld [vmem:[%s2] sm:$0x1]
    %v88 = vlaneseq
    %v89 = vshrl.u32 %v88, 7
    %v90 = vsub.s32 0, %v89
    %v91 = vrot.slane %v86, %v90
    %v97 = vunpack.c.l.b16 %v50
    %v98 = vunpack.c.h.b16 %v50
    %v99 = vunpack.c.l.b16 %v51
    %v100 = vunpack.c.h.b16 %v51
    %v101 = vunpack.c.l.b16 %v52
    %v102 = vunpack.c.h.b16 %v52
    %v103 = vunpack.c.l.b16 %v53
    %v104 = vunpack.c.h.b16 %v53
    %v105 = vpack.c.b16 %v99, %v97
    %v106 = vpack.c.b16 %v100, %v98
    %v107 = vpack.c.b16 %v103, %v101
    %v108 = vpack.c.b16 %v104, %v102
    %v145 = vunpack.c.l.b16 %v54
    %v146 = vunpack.c.l.b16 %v55
    %v147 = vunpack.c.l.b16 %v56
    %v148 = vunpack.c.l.b16 %v57
    %v149 = vunpack.c.l.b16 %v58
    %v150 = vunpack.c.l.b16 %v59
    %v151 = vunpack.c.l.b16 %v60
    %v152 = vunpack.c.l.b16 %v61
    %v153 = vunpack.c.l.b16 %v62
    %v154 = vunpack.c.l.b16 %v63
    %v155 = vunpack.c.l.b16 %v64
    %v156 = vunpack.c.l.b16 %v65
    %v157 = vunpack.c.l.b16 %v66
    %v158 = vunpack.c.l.b16 %v67
    %v159 = vunpack.c.l.b16 %v68
    %v160 = vunpack.c.l.b16 %v69
    %v161 = vunpack.c.l.b16 %v70
    %v162 = vunpack.c.l.b16 %v71
    %v163 = vunpack.c.l.b16 %v72
    %v164 = vunpack.c.l.b16 %v73
    %v165 = vunpack.c.l.b16 %v74
    %v166 = vunpack.c.l.b16 %v75
    %v167 = vunpack.c.l.b16 %v76
    %v168 = vunpack.c.l.b16 %v77
    %v169 = vunpack.c.l.b16 %v78
    %v170 = vunpack.c.l.b16 %v79
    %v171 = vunpack.c.l.b16 %v80
    %v172 = vunpack.c.l.b16 %v81
    %v173 = vunpack.c.l.b16 %v82
    %v174 = vunpack.c.l.b16 %v83
    %v175 = vunpack.c.l.b16 %v84
    %v176 = vunpack.c.l.b16 %v85
    %v177 = vpack.c.b16 %v146, %v145
    %v178 = vpack.c.b16 %v148, %v147
    %v179 = vpack.c.b16 %v150, %v149
    %v180 = vpack.c.b16 %v152, %v151
    %v181 = vpack.c.b16 %v154, %v153
    %v182 = vpack.c.b16 %v156, %v155
    %v183 = vpack.c.b16 %v158, %v157
    %v184 = vpack.c.b16 %v160, %v159
    %v185 = vpack.c.b16 %v162, %v161
    %v186 = vpack.c.b16 %v164, %v163
    %v187 = vpack.c.b16 %v166, %v165
    %v188 = vpack.c.b16 %v168, %v167
    %v189 = vpack.c.b16 %v170, %v169
    %v190 = vpack.c.b16 %v172, %v171
    %v191 = vpack.c.b16 %v174, %v173
    %v192 = vpack.c.b16 %v176, %v175
    %209 = vmatprep.subr.bf16.mxu0 0
    %210 = vmatpush1.bf16.msra.mxu0 %v184
    %211 = vmatprep.subr.bf16.mxu0 0
    %212 = vmatpush1.bf16.msra.mxu0 %v183
    %213 = vmatprep.subr.bf16.mxu0 0
    %214 = vmatpush1.bf16.msra.mxu0 %v182
    %215 = vmatprep.subr.bf16.mxu0 0
    %216 = vmatpush1.bf16.msra.mxu0 %v181
    %217 = vmatprep.subr.bf16.mxu0 0
    %218 = vmatpush1.bf16.msra.mxu0 %v180
    %219 = vmatprep.subr.bf16.mxu0 0
    %220 = vmatpush1.bf16.msra.mxu0 %v179
    %221 = vmatprep.subr.bf16.mxu0 0
    %222 = vmatpush1.bf16.msra.mxu0 %v178
    %223 = vmatprep.subr.bf16.mxu0 0
    %224 = vmatpush1.bf16.msra.mxu0 %v177
    %225 = vmatprep.subr.bf16.mxu0 0
    %226 = vmatpush2.bf16.msra.mxu0 %v192
    %227 = vmatprep.subr.bf16.mxu0 0
    %228 = vmatpush2.bf16.msra.mxu0 %v191
    %229 = vmatprep.subr.bf16.mxu0 0
    %230 = vmatpush2.bf16.msra.mxu0 %v190
    %231 = vmatprep.subr.bf16.mxu0 0
    %232 = vmatpush2.bf16.msra.mxu0 %v189
    %233 = vmatprep.subr.bf16.mxu0 0
    %234 = vmatpush2.bf16.msra.mxu0 %v188
    %235 = vmatprep.subr.bf16.mxu0 0
    %236 = vmatpush2.bf16.msra.mxu0 %v187
    %237 = vmatprep.subr.bf16.mxu0 0
    %238 = vmatpush2.bf16.msra.mxu0 %v186
    %239 = vmatprep.subr.bf16.mxu0 0
    %240 = vmatpush2.bf16.msra.mxu0 %v185
    %241 = vmatprep.mubr.bf16.mxu0 %v106
    %242 = vmatmul.mubr.bf16.gmra.mxu0 %v105
    %v243 = vpop.f32.mrf.mxu0
    %v244 = vadd.f32 %v91, %v243
    %v245 = vpop.f32.mrf.mxu0
    %v246 = vpop.f32.mrf.mxu0
    %v247 = vadd.f32 %v91, %v246
    %v248 = vpop.f32.mrf.mxu0
    %249 = vmatprep.mubr.bf16.mxu0 %v108
    %250 = vmatmul.mubr.bf16.gmra.mxu0 %v107
    %v251 = vpop.f32.mrf.mxu0
    %v252 = vadd.f32 %v91, %v251
    %v253 = vpop.f32.mrf.mxu0
    %v254 = vpop.f32.mrf.mxu0
    %v255 = vadd.f32 %v91, %v254
    %v256 = vpop.f32.mrf.mxu0
    %257 = vdwg.mxu0
    %258 = vadd.xlane.f32.xlu0 %v244
    %v259 = vpop.xlane.xlu0 %258
    %260 = vadd.xlane.f32.xlu0 %v247
    %v261 = vpop.xlane.xlu0 %260
    %262 = vadd.xlane.f32.xlu0 %v252
    %v263 = vpop.xlane.xlu0 %262
    %264 = vadd.xlane.f32.xlu0 %v255
    %v265 = vpop.xlane.xlu0 %264
    %v266 = vmul.f32 %v259, 0.03125
    %v267 = vmul.f32 %v261, 0.03125
    %v268 = vmul.f32 %v263, 0.03125
    %v269 = vmul.f32 %v265, 0.03125
    %v270 = vlaneseq
    %v271 = vand.u32 %v270, 127
    %vm272 = vcmp.lt.s32.totalorder %v271, 32
    %v273 = vsub.f32 %v244, %v266
    %v274 = vsub.f32 %v247, %v267
    %v275 = vsub.f32 %v252, %v268
    %v276 = vsub.f32 %v255, %v269
    %v277 = vsel %vm272, %v273, 0.0
    %v278 = vsel %vm272, %v274, 0.0
    %v279 = vsel %vm272, %v275, 0.0
    %v280 = vsel %vm272, %v276, 0.0
    %v281 = vmul.f32 %v277, %v277
    %v282 = vmul.f32 %v278, %v278
    %v283 = vmul.f32 %v279, %v279
    %v284 = vmul.f32 %v280, %v280
    %285 = vadd.xlane.f32.xlu0 %v281
    %v286 = vpop.xlane.xlu0 %285
    %287 = vadd.xlane.f32.xlu0 %v282
    %v288 = vpop.xlane.xlu0 %287
    %289 = vadd.xlane.f32.xlu0 %v283
    %v290 = vpop.xlane.xlu0 %289
    %291 = vadd.xlane.f32.xlu0 %v284
    %v292 = vpop.xlane.xlu0 %291
    %v293 = vmul.f32 %v286, 0.03125
    %v294 = vmul.f32 %v288, 0.03125
    %v295 = vmul.f32 %v290, 0.03125
    %v296 = vmul.f32 %v292, 0.03125
    %v297 = vadd.f32 %v293, 1e-05
    %v298 = vadd.f32 %v294, 1e-05
    %v299 = vadd.f32 %v295, 1e-05
    %v300 = vadd.f32 %v296, 1e-05
    %v301 = vrsqrt.pop %v297
    %v302 = vrsqrt.pop %v298
    %v303 = vrsqrt.pop %v299
    %v304 = vrsqrt.pop %v300
    %v305 = vmul.f32 %v277, %v301
    %v306 = vmul.f32 %v278, %v302
    %v307 = vmul.f32 %v279, %v303
    %v308 = vmul.f32 %v280, %v304
    %v309 = vld [vmem:[%s3] sm:$0x1]
    %v311 = vlaneseq
    %v312 = vshrl.u32 %v311, 7
    %v313 = vsub.s32 0, %v312
    %v314 = vrot.slane %v309, %v313
    %v316 = vmul.f32 %v305, %v314
    %v317 = vmul.f32 %v306, %v314
    %v318 = vmul.f32 %v307, %v314
    %v319 = vmul.f32 %v308, %v314
    %v320 = vld [vmem:[%s4] sm:$0x1]
    %v322 = vlaneseq
    %v323 = vshrl.u32 %v322, 7
    %v324 = vsub.s32 0, %v323
    %v325 = vrot.slane %v320, %v324
    %v327 = vadd.f32 %v316, %v325
    %v328 = vadd.f32 %v317, %v325
    %v329 = vadd.f32 %v318, %v325
    %v330 = vadd.f32 %v319, %v325
    %331 = vst [vmem:[#allocation7] sm:$0xff] %v327
    %332 = vst [vmem:[#allocation7 + $0x8] sm:$0xff] %v328
    %333 = vst [vmem:[#allocation7 + $0x10] sm:$0xff] %v329
    %334 = vst [vmem:[#allocation7 + $0x18] sm:$0xff] %v330
    // Predicated region
    $region30: #{tpu_custom_call.1} parent=1 // pred_check
      _
    $region31: #{tpu_custom_call.1} parent=1 // pred_check_branch
      %336 = sbr.rel (0) target = $region33
    $region32: #{tpu_custom_call.1} parent=1 // pred_region
      %s338 = ssub.s32 512, 512
      %339 = vsyncadd [#allocation4], %s338
      %s340 = sshll.u32 [#allocation7], 4
      %s341 = int_to_ptr.vmem [resolvable:$true] %s340
      %346 = dma.vmem_to_hbm [thread:$0]  %s341, 512, %s5, [#allocation4], 128, 128, 8
    $region33: #{tpu_custom_call.1} parent=1 // pred_fallthru
      _
    // Predicated region
    $region34: #{tpu_custom_call.1} parent=1 // pred_check
      _
    $region35: #{tpu_custom_call.1} parent=1 // pred_check_branch
      %348 = sbr.rel (0) target = $region37
    $region36: #{tpu_custom_call.1} parent=1 // pred_region
      %349 = dma.done [#allocation4], 512
    $region37: #{tpu_custom_call.1} parent=1 // pred_fallthru
      _
    %350 = vsyncpa [#allocation3], 1
    %351 = vsyncpa [#allocation6], 1
    %352 = vsyncpa [#allocation4], 1

</llo_original>
